<compile_context>
chip_gen: v7x
topology: tpu7x:2x2x1
jax: 0.10.0
libtpu: 0.0.40
codegen_flags: <defaults>
</compile_context>

<pallas_src>
import jax
import jax.numpy as jnp
from jax.experimental import pallas as pl
from jax.experimental.pallas import tpu as pltpu


# ----------------------------- kernels --------------------------------------


def _feat_kernel(z_ref, w_ref, h_ref):
    # H_tile = Z_tile @ W   (f32 accumulate on MXU, stored bf16)
    h_ref[...] = jnp.dot(
        z_ref[...], w_ref[...], preferred_element_type=jnp.float32
    ).astype(h_ref.dtype)


def _agg_kernel(a_ref, h_ref, b_ref, o_ref, acc_ref):
    # out_tile = sum_k A[i, k] @ H[k]  + bias   (f32 VMEM accumulator)
    k = pl.program_id(1)

    @pl.when(k == 0)
    def _():
        acc_ref[...] = jnp.zeros_like(acc_ref)

    acc_ref[...] += jnp.dot(
        a_ref[...], h_ref[...], preferred_element_type=jnp.float32
    )

    @pl.when(k == pl.num_programs(1) - 1)
    def _():
        o_ref[...] = (acc_ref[...] + b_ref[...]).astype(o_ref.dtype)


# ----------------------------- wrapper ---------------------------------------


def _round_up(x, m):
    return ((x + m - 1) // m) * m


def _pick_tile(n):
    # Lane-aligned square tile for A.  512x512 bf16 = 0.5 MiB (x2 buffers):
    # comfortably under v5e's 16 MiB scoped-VMEM default and v7x's 64 MiB VMEM,
    # while big enough to sit near the HBM roofline on v6e.
    return min(512, _round_up(max(n, 1), 128))


def gcn_conv_pallas(a_norm, z, w, b):
    """a_norm: [N, N] float, z: [N, L] f32, w: [L, O] f32, b: [O] f32 -> [N, O] f32."""
    n, l = z.shape
    o = w.shape[1]

    t = _pick_tile(n)
    n_pad = _round_up(n, t)
    l_pad = _round_up(l, 128)
    o_pad = _round_up(o, 128)

    # zero-pad: padded rows/cols contribute nothing and are sliced off below
    a_p = (
        jnp.zeros((n_pad, n_pad), jnp.bfloat16)
        .at[:n, :n]
        .set(a_norm.astype(jnp.bfloat16))
    )
    z_p = jnp.zeros((n_pad, l_pad), jnp.float32).at[:n, :l].set(z)
    w_p = jnp.zeros((l_pad, o_pad), jnp.float32).at[:l, :o].set(w)
    b_p = jnp.zeros((1, o_pad), jnp.float32).at[0, :o].set(b)

    n_row_tiles = n_pad // t
    n_k_tiles = n_pad // t

    # --- pass 1: H = Z @ W  (feature transform) ------------------------------
    h_p = pl.pallas_call(
        _feat_kernel,
        out_shape=jax.ShapeDtypeStruct((n_pad, o_pad), jnp.bfloat16),
        grid_spec=pl.GridSpec(
            grid=(n_row_tiles,),
            in_specs=[
                pl.BlockSpec((t, l_pad), lambda i: (i, 0)),
                pl.BlockSpec((l_pad, o_pad), lambda i: (0, 0)),
            ],
            out_specs=pl.BlockSpec((t, o_pad), lambda i: (i, 0)),
        ),
        compiler_params=pltpu.CompilerParams(
            dimension_semantics=("parallel",)
        ),
    )(z_p, w_p)

    # --- pass 2: out = A_norm @ H + b  (aggregation, tiled + accumulated) ----
    cost = pl.CostEstimate(
        flops=2 * n_pad * n_pad * o_pad,
        transcendentals=0,
        bytes_accessed=(
            n_pad * n_pad * 2          # A (bf16)
            + n_pad * o_pad * 2        # H (bf16), read n_row_tiles times logically
            + n_pad * o_pad * 4        # out (f32)
        ),
    )

    out_p = pl.pallas_call(
        _agg_kernel,
        out_shape=jax.ShapeDtypeStruct((n_pad, o_pad), jnp.float32),
        grid_spec=pltpu.PrefetchScalarGridSpec(
            num_scalar_prefetch=0,
            grid=(n_row_tiles, n_k_tiles),
            in_specs=[
                pl.BlockSpec((t, t), lambda i, k: (i, k)),        # A tile
                pl.BlockSpec((t, o_pad), lambda i, k: (k, 0)),    # H tile
                pl.BlockSpec((1, o_pad), lambda i, k: (0, 0)),    # bias
            ],
            out_specs=pl.BlockSpec((t, o_pad), lambda i, k: (i, 0)),
            scratch_shapes=[pltpu.VMEM((t, o_pad), jnp.float32)],
        ),
        compiler_params=pltpu.CompilerParams(
            dimension_semantics=("parallel", "arbitrary")
        ),
        cost_estimate=cost,
    )(a_p, h_p, b_p)

    return out_p[:n, :o]


# ----------------------------- graph glue ------------------------------------


def build_normalized_adjacency(edge_index, num_nodes):
    """Dense D^{-1/2} (A + I) D^{-1/2} matching GCNConv's gcn_norm (plain JAX)."""
    row, col = edge_index[0], edge_index[1]  # edges: row (source j) -> col (target i)
    loop = jnp.arange(num_nodes, dtype=edge_index.dtype)
    row = jnp.concatenate([row, loop])
    col = jnp.concatenate([col, loop])
    a_hat = jnp.zeros((num_nodes, num_nodes), dtype=jnp.float32)
    a_hat = a_hat.at[col, row].add(1.0)
    deg = a_hat.sum(axis=1)  # in-degree (incl. self loop)
    dinv = jnp.where(deg > 0, 1.0 / jnp.sqrt(deg), 0.0)
    return dinv[:, None] * a_hat * dinv[None, :]


class GraphDecoderPallas:
    """JAX/Pallas port of GraphDecoder(latent_dim, output_dim) = GCNConv."""

    def __init__(self, latent_dim, output_dim, key):
        kw, _ = jax.random.split(key)
        # Glorot init like GCNConv's Linear; stored already transposed: [latent, out]
        limit = jnp.sqrt(6.0 / (latent_dim + output_dim))
        self.w = jax.random.uniform(
            kw, (latent_dim, output_dim), jnp.float32, -limit, limit
        )
        self.b = jnp.zeros((output_dim,), jnp.float32)  # GCNConv bias init = zeros

    def __call__(self, z, edge_index):
        n = z.shape[0]
        a_norm = build_normalized_adjacency(edge_index, n)
        return gcn_conv_pallas(a_norm, z.astype(jnp.float32), self.w, self.b)


# ----------------------------- demo / check ----------------------------------

if __name__ == "__main__":
    key = jax.random.PRNGKey(0)
    k_z, k_p = jax.random.split(key)

    # small synthetic graph: 8 nodes, bidirectional ring
    num_nodes = 8
    latent_dim = 32
    output_dim = 16

    src = jnp.arange(num_nodes, dtype=jnp.int32)
    dst = (src + 1) % num_nodes
    edge_index = jnp.stack(
        [jnp.concatenate([src, dst]), jnp.concatenate([dst, src])], axis=0
    )  # [2, 2*N]

    z = jax.random.normal(k_z, (num_nodes, latent_dim), jnp.float32)

    decoder = GraphDecoderPallas(latent_dim, output_dim, k_p)
    out = decoder(z, edge_index)
    out = jax.block_until_ready(out)

    # sanity check vs. pure-f32 JAX reference of the same math
    # (bf16 matmul inputs with f32 accumulation -> modest tolerance)
    a_norm = build_normalized_adjacency(edge_index, num_nodes)
    ref = a_norm @ (z @ decoder.w) + decoder.b[None, :]
    assert out.shape == (num_nodes, output_dim)
    assert jnp.allclose(out, ref, atol=5e-2, rtol=5e-2)

    print("KERNEL_OK")
</pallas_src>

<mosaic_0001>
module attributes {stable_mosaic.version = 11 : i64} {
  func.func @_feat_kernel(%arg0: i32, %arg1: memref<128x128xf32, #tpu.memory_space<vmem>>, %arg2: memref<128x128xf32, #tpu.memory_space<vmem>>, %arg3: memref<128x128xbf16, #tpu.memory_space<vmem>>) attributes {dimension_semantics = [#tpu.dimension_semantics<parallel>], iteration_bounds = array<i64: 1>, scalar_prefetch = 0 : i64, scratch_operands = 0 : i64, tpu.core_type = #tpu.core_type<tc>, window_params = [{transform_indices = @transform_0, window_bounds = array<i64: 128, 128>}, {pipeline_mode = #tpu.pipeline_mode<synchronous>, transform_indices = @transform_1, window_bounds = array<i64: 128, 128>}, {transform_indices = @transform_2, window_bounds = array<i64: 128, 128>}]} {
    %c0 = arith.constant 0 : index
    %c0_0 = arith.constant 0 : index
    %0 = vector.load %arg1[%c0, %c0_0] : memref<128x128xf32, #tpu.memory_space<vmem>>, vector<128x128xf32>
    %c0_1 = arith.constant 0 : index
    %c0_2 = arith.constant 0 : index
    %1 = vector.load %arg2[%c0_1, %c0_2] : memref<128x128xf32, #tpu.memory_space<vmem>>, vector<128x128xf32>
    %cst = arith.constant dense<0.000000e+00> : vector<128x128xf32>
    %2 = tpu.matmul %0, %1, %cst {dimension_numbers = #tpu.dot_dimension_numbers<[1], [0], [0], [1], [0, 0, 1, 1], [], []>} : vector<128x128xf32>, vector<128x128xf32>, vector<128x128xf32> -> vector<128x128xf32>
    %3 = arith.truncf %2 : vector<128x128xf32> to vector<128x128xbf16>
    %c0_3 = arith.constant 0 : index
    %c0_4 = arith.constant 0 : index
    %4 = vector.load %arg3[%c0_3, %c0_4] : memref<128x128xbf16, #tpu.memory_space<vmem>>, vector<128x128xbf16>
    tpu.vector_store %arg3[%c0_3, %c0_4], %3 {strides = array<i32>} : memref<128x128xbf16, #tpu.memory_space<vmem>>, vector<128x128xbf16>,
    return
  }
  func.func @transform_0(%arg0: i32) -> (i32, i32) {
    %c0_i32 = arith.constant 0 : i32
    %c0_i32_0 = arith.constant 0 : i32
    return %arg0, %c0_i32 : i32, i32
  }
  func.func @transform_1(%arg0: i32) -> (i32, i32) {
    %c0_i32 = arith.constant 0 : i32
    %c0_i32_0 = arith.constant 0 : i32
    %c0_i32_1 = arith.constant 0 : i32
    return %c0_i32, %c0_i32_0 : i32, i32
  }
  func.func @transform_2(%arg0: i32) -> (i32, i32) {
    %c0_i32 = arith.constant 0 : i32
    %c0_i32_0 = arith.constant 0 : i32
    return %arg0, %c0_i32 : i32, i32
  }
}

</mosaic_0001>

<llo_original>
// kernel: tpu_custom_call.1
$region0: #{tpu_custom_call.1}
  #allocation0 [shape = 'u32[]', space=smem, size = 0x4, offset = 0x4, fixed_abs, tag = 'smem constant byte address 0x4 - core index']
  #allocation1 [shape = 'u32[144,128]{1,0:T(1,128)}', space=vmem, size = 0x12000, scoped, tag = 'internal scratch']
  %s0 = inlined_call_operand.hbm [shape: f32[128,128], index: 0, kind: input, shape index: {}]
  %s1 = inlined_call_operand.hbm [shape: f32[128,128], index: 1, kind: input, shape index: {}]
  %s2 = inlined_call_operand.hbm [shape: bf16[128,128], index: 2, kind: output, shape index: {}]
  %s3 = sld [smem:[#allocation0]]
  $region26: #{tpu_custom_call.1} parent=0
    _
  %s5 = ssub.s32 1, %s3
  %s6 = scalar_select 0, %s5, %s3
  $region1: #{tpu_custom_call.1} parent=0
    #allocation2 [shape = 'u8[65536]{0}', space=vmem, size = 0x10000, scoped, tag = 'input window, operand 0, single buffered']
    #allocation3 [shape = 's32[1]{0}', space=sflag, size = 0x4, scoped, tag = 'scoped memory for tpu_custom_call.1']
    #allocation4 [shape = 's32[1]{0}', space=sflag, size = 0x4, scoped, tag = 'scoped memory for tpu_custom_call.1']
    #allocation5 [shape = 'u8[65536]{0}', space=vmem, size = 0x10000, scoped, tag = 'input window, operand 1, single buffered']
    #allocation6 [shape = 's32[1]{0}', space=sflag, size = 0x4, scoped, tag = 'scoped memory for tpu_custom_call.1']
    #allocation7 [shape = 'u8[32768]{0}', space=vmem, size = 0x8000, scoped, tag = 'output window, operand 0, single buffered']
    %7 = vsyncpa [#allocation3], 0
    %8 = vsyncpa [#allocation6], 0
    %9 = vsyncpa [#allocation4], 0
    // Predicated region
    $region2: #{tpu_custom_call.1} parent=1 // pred_check
      _
    $region3: #{tpu_custom_call.1} parent=1 // pred_check_branch
      %11 = sbr.rel (0) target = $region5
    $region4: #{tpu_custom_call.1} parent=1 // pred_region
      %s13 = ssub.s32 2048, 2048
      %14 = vsyncadd [#allocation3], %s13
      %s15 = sshll.u32 [#allocation2], 4
      %s16 = int_to_ptr.vmem [resolvable:$true] %s15
      %21 = dma.hbm_to_vmem [thread:$0]  %s0, 2048, %s16, [#allocation3], 128, 128, 8
    $region5: #{tpu_custom_call.1} parent=1 // pred_fallthru
      _
    // Predicated region
    $region6: #{tpu_custom_call.1} parent=1 // pred_check
      _
    $region7: #{tpu_custom_call.1} parent=1 // pred_check_branch
      %23 = sbr.rel (0) target = $region9
    $region8: #{tpu_custom_call.1} parent=1 // pred_region
      %s25 = ssub.s32 2048, 2048
      %26 = vsyncadd [#allocation6], %s25
      %s27 = sshll.u32 [#allocation5], 4
      %s28 = int_to_ptr.vmem [resolvable:$true] %s27
      %33 = dma.hbm_to_vmem [thread:$0]  %s1, 2048, %s28, [#allocation6], 128, 128, 8
    $region9: #{tpu_custom_call.1} parent=1 // pred_fallthru
      _
    // Predicated region
    $region10: #{tpu_custom_call.1} parent=1 // pred_check
      _
    $region11: #{tpu_custom_call.1} parent=1 // pred_check_branch
      %35 = sbr.rel (0) target = $region13
    $region12: #{tpu_custom_call.1} parent=1 // pred_region
      %36 = dma.done [#allocation3], 2048
    $region13: #{tpu_custom_call.1} parent=1 // pred_fallthru
      _
    // Predicated region
    $region14: #{tpu_custom_call.1} parent=1 // pred_check
      _
    $region15: #{tpu_custom_call.1} parent=1 // pred_check_branch
      %38 = sbr.rel (0) target = $region17
    $region16: #{tpu_custom_call.1} parent=1 // pred_region
      %39 = dma.done [#allocation6], 2048
    $region17: #{tpu_custom_call.1} parent=1 // pred_fallthru
      _
    %v40 = vld [vmem:[#allocation2] sm:$0xff]
    %v41 = vld [vmem:[#allocation2 + $0x8] sm:$0xff]
    %v42 = vld [vmem:[#allocation2 + $0x10] sm:$0xff]
    %v43 = vld [vmem:[#allocation2 + $0x18] sm:$0xff]
    %v44 = vld [vmem:[#allocation2 + $0x20] sm:$0xff]
    %v45 = vld [vmem:[#allocation2 + $0x28] sm:$0xff]
    %v46 = vld [vmem:[#allocation2 + $0x30] sm:$0xff]
    %v47 = vld [vmem:[#allocation2 + $0x38] sm:$0xff]
    %v48 = vld [vmem:[#allocation2 + $0x40] sm:$0xff]
    %v49 = vld [vmem:[#allocation2 + $0x48] sm:$0xff]
    %v50 = vld [vmem:[#allocation2 + $0x50] sm:$0xff]
    %v51 = vld [vmem:[#allocation2 + $0x58] sm:$0xff]
    %v52 = vld [vmem:[#allocation2 + $0x60] sm:$0xff]
    %v53 = vld [vmem:[#allocation2 + $0x68] sm:$0xff]
    %v54 = vld [vmem:[#allocation2 + $0x70] sm:$0xff]
    %v55 = vld [vmem:[#allocation2 + $0x78] sm:$0xff]
    %v56 = vld [vmem:[#allocation5] sm:$0xff]
    %v57 = vld [vmem:[#allocation5 + $0x8] sm:$0xff]
    %v58 = vld [vmem:[#allocation5 + $0x10] sm:$0xff]
    %v59 = vld [vmem:[#allocation5 + $0x18] sm:$0xff]
    %v60 = vld [vmem:[#allocation5 + $0x20] sm:$0xff]
    %v61 = vld [vmem:[#allocation5 + $0x28] sm:$0xff]
    %v62 = vld [vmem:[#allocation5 + $0x30] sm:$0xff]
    %v63 = vld [vmem:[#allocation5 + $0x38] sm:$0xff]
    %v64 = vld [vmem:[#allocation5 + $0x40] sm:$0xff]
    %v65 = vld [vmem:[#allocation5 + $0x48] sm:$0xff]
    %v66 = vld [vmem:[#allocation5 + $0x50] sm:$0xff]
    %v67 = vld [vmem:[#allocation5 + $0x58] sm:$0xff]
    %v68 = vld [vmem:[#allocation5 + $0x60] sm:$0xff]
    %v69 = vld [vmem:[#allocation5 + $0x68] sm:$0xff]
    %v70 = vld [vmem:[#allocation5 + $0x70] sm:$0xff]
    %v71 = vld [vmem:[#allocation5 + $0x78] sm:$0xff]
    %72 = vmatprep.subr.mxu0 0.0
    %73 = vmatpush1.msra.mxu0 %v56
    %74 = vmatprep.subr.mxu0 0.0
    %75 = vmatpush1.msra.mxu0 %v57
    %76 = vmatprep.subr.mxu0 0.0
    %77 = vmatpush1.msra.mxu0 %v58
    %78 = vmatprep.subr.mxu0 0.0
    %79 = vmatpush1.msra.mxu0 %v59
    %80 = vmatprep.subr.mxu0 0.0
    %81 = vmatpush1.msra.mxu0 %v60
    %82 = vmatprep.subr.mxu0 0.0
    %83 = vmatpush1.msra.mxu0 %v61
    %84 = vmatprep.subr.mxu0 0.0
    %85 = vmatpush1.msra.mxu0 %v62
    %86 = vmatprep.subr.mxu0 0.0
    %87 = vmatpush1.msra.mxu0 %v63
    %88 = vmatprep.subr.mxu0 0.0
    %89 = vmatpush1.msra.mxu0 %v64
    %90 = vmatprep.subr.mxu0 0.0
    %91 = vmatpush1.msra.mxu0 %v65
    %92 = vmatprep.subr.mxu0 0.0
    %93 = vmatpush1.msra.mxu0 %v66
    %94 = vmatprep.subr.mxu0 0.0
    %95 = vmatpush1.msra.mxu0 %v67
    %96 = vmatprep.subr.mxu0 0.0
    %97 = vmatpush1.msra.mxu0 %v68
    %98 = vmatprep.subr.mxu0 0.0
    %99 = vmatpush1.msra.mxu0 %v69
    %100 = vmatprep.subr.mxu0 0.0
    %101 = vmatpush1.msra.mxu0 %v70
    %102 = vmatprep.subr.mxu0 0.0
    %103 = vmatpush1.msra.mxu0 %v71
    %104 = vmatprep.subr.mxu0 0.0
    %105 = vmatpush1.msra.mxu0 0.0
    %106 = vmatprep.subr.mxu0 0.0
    %107 = vmatpush1.msra.mxu0 0.0
    %108 = vmatprep.subr.mxu0 0.0
    %109 = vmatpush1.msra.mxu0 0.0
    %110 = vmatprep.subr.mxu0 0.0
    %111 = vmatpush1.msra.mxu0 0.0
    %112 = vmatprep.subr.mxu0 0.0
    %113 = vmatpush1.msra.mxu0 0.0
    %114 = vmatprep.subr.mxu0 0.0
    %115 = vmatpush1.msra.mxu0 0.0
    %116 = vmatprep.subr.mxu0 0.0
    %117 = vmatpush1.msra.mxu0 0.0
    %118 = vmatprep.subr.mxu0 0.0
    %119 = vmatpush1.msra.mxu0 0.0
    %120 = vmatprep.subr.mxu0 0.0
    %121 = vmatpush1.msra.mxu0 0.0
    %122 = vmatprep.subr.mxu0 0.0
    %123 = vmatpush1.msra.mxu0 0.0
    %124 = vmatprep.subr.mxu0 0.0
    %125 = vmatpush1.msra.mxu0 0.0
    %126 = vmatprep.subr.mxu0 0.0
    %127 = vmatpush1.msra.mxu0 0.0
    %128 = vmatprep.subr.mxu0 0.0
    %129 = vmatpush1.msra.mxu0 0.0
    %130 = vmatprep.subr.mxu0 0.0
    %131 = vmatpush1.msra.mxu0 0.0
    %132 = vmatprep.subr.mxu0 0.0
    %133 = vmatpush1.msra.mxu0 0.0
    %134 = vmatprep.subr.mxu0 0.0
    %135 = vmatpush1.msra.mxu0 0.0
    %136 = vmatprep.mubr.f32.mxu0 0.0
    %137 = vmatmul.mubr.f32.gmra.mrb[0].mxu0 %v40
    %v138 = vpop.f32.mrb[0].mxu0
    %v139 = vadd.f32 0.0, %v138
    %v140 = vpop.f32.mrb[0].mxu0
    %141 = vmatprep.mubr.f32.mxu0 0.0
    %142 = vmatmul.mubr.f32.gmra.mrb[0].mxu0 %v41
    %v143 = vpop.f32.mrb[0].mxu0
    %v144 = vadd.f32 0.0, %v143
    %v145 = vpop.f32.mrb[0].mxu0
    %146 = vmatprep.mubr.f32.mxu0 0.0
    %147 = vmatmul.mubr.f32.gmra.mrb[0].mxu0 %v42
    %v148 = vpop.f32.mrb[0].mxu0
    %v149 = vadd.f32 0.0, %v148
    %v150 = vpop.f32.mrb[0].mxu0
    %151 = vmatprep.mubr.f32.mxu0 0.0
    %152 = vmatmul.mubr.f32.gmra.mrb[0].mxu0 %v43
    %v153 = vpop.f32.mrb[0].mxu0
    %v154 = vadd.f32 0.0, %v153
    %v155 = vpop.f32.mrb[0].mxu0
    %156 = vmatprep.mubr.f32.mxu0 0.0
    %157 = vmatmul.mubr.f32.gmra.mrb[0].mxu0 %v44
    %v158 = vpop.f32.mrb[0].mxu0
    %v159 = vadd.f32 0.0, %v158
    %v160 = vpop.f32.mrb[0].mxu0
    %161 = vmatprep.mubr.f32.mxu0 0.0
    %162 = vmatmul.mubr.f32.gmra.mrb[0].mxu0 %v45
    %v163 = vpop.f32.mrb[0].mxu0
    %v164 = vadd.f32 0.0, %v163
    %v165 = vpop.f32.mrb[0].mxu0
    %166 = vmatprep.mubr.f32.mxu0 0.0
    %167 = vmatmul.mubr.f32.gmra.mrb[0].mxu0 %v46
    %v168 = vpop.f32.mrb[0].mxu0
    %v169 = vadd.f32 0.0, %v168
    %v170 = vpop.f32.mrb[0].mxu0
    %171 = vmatprep.mubr.f32.mxu0 0.0
    %172 = vmatmul.mubr.f32.gmra.mrb[0].mxu0 %v47
    %v173 = vpop.f32.mrb[0].mxu0
    %v174 = vadd.f32 0.0, %v173
    %v175 = vpop.f32.mrb[0].mxu0
    %176 = vmatprep.mubr.f32.mxu0 0.0
    %177 = vmatmul.mubr.f32.gmra.mrb[0].mxu0 %v48
    %v178 = vpop.f32.mrb[0].mxu0
    %v179 = vadd.f32 0.0, %v178
    %v180 = vpop.f32.mrb[0].mxu0
    %181 = vmatprep.mubr.f32.mxu0 0.0
    %182 = vmatmul.mubr.f32.gmra.mrb[0].mxu0 %v49
    %v183 = vpop.f32.mrb[0].mxu0
    %v184 = vadd.f32 0.0, %v183
    %v185 = vpop.f32.mrb[0].mxu0
    %186 = vmatprep.mubr.f32.mxu0 0.0
    %187 = vmatmul.mubr.f32.gmra.mrb[0].mxu0 %v50
    %v188 = vpop.f32.mrb[0].mxu0
    %v189 = vadd.f32 0.0, %v188
    %v190 = vpop.f32.mrb[0].mxu0
    %191 = vmatprep.mubr.f32.mxu0 0.0
    %192 = vmatmul.mubr.f32.gmra.mrb[0].mxu0 %v51
    %v193 = vpop.f32.mrb[0].mxu0
    %v194 = vadd.f32 0.0, %v193
    %v195 = vpop.f32.mrb[0].mxu0
    %196 = vmatprep.mubr.f32.mxu0 0.0
    %197 = vmatmul.mubr.f32.gmra.mrb[0].mxu0 %v52
    %v198 = vpop.f32.mrb[0].mxu0
    %v199 = vadd.f32 0.0, %v198
    %v200 = vpop.f32.mrb[0].mxu0
    %201 = vmatprep.mubr.f32.mxu0 0.0
    %202 = vmatmul.mubr.f32.gmra.mrb[0].mxu0 %v53
    %v203 = vpop.f32.mrb[0].mxu0
    %v204 = vadd.f32 0.0, %v203
    %v205 = vpop.f32.mrb[0].mxu0
    %206 = vmatprep.mubr.f32.mxu0 0.0
    %207 = vmatmul.mubr.f32.gmra.mrb[0].mxu0 %v54
    %v208 = vpop.f32.mrb[0].mxu0
    %v209 = vadd.f32 0.0, %v208
    %v210 = vpop.f32.mrb[0].mxu0
    %211 = vmatprep.mubr.f32.mxu0 0.0
    %212 = vmatmul.mubr.f32.gmra.mrb[0].mxu0 %v55
    %v213 = vpop.f32.mrb[0].mxu0
    %v214 = vadd.f32 0.0, %v213
    %v215 = vpop.f32.mrb[0].mxu0
    %216 = vdwg.mxu0
    %v217 = vpack.c.bf16 %v144, %v139
    %v218 = vpack.c.bf16 %v154, %v149
    %v219 = vpack.c.bf16 %v164, %v159
    %v220 = vpack.c.bf16 %v174, %v169
    %v221 = vpack.c.bf16 %v184, %v179
    %v222 = vpack.c.bf16 %v194, %v189
    %v223 = vpack.c.bf16 %v204, %v199
    %v224 = vpack.c.bf16 %v214, %v209
    %v233 = vunpack.c.l.b16 %v217
    %v234 = vunpack.c.h.b16 %v217
    %v235 = vunpack.c.l.b16 %v218
    %v236 = vunpack.c.h.b16 %v218
    %v237 = vunpack.c.l.b16 %v219
    %v238 = vunpack.c.h.b16 %v219
    %v239 = vunpack.c.l.b16 %v220
    %v240 = vunpack.c.h.b16 %v220
    %v241 = vunpack.c.l.b16 %v221
    %v242 = vunpack.c.h.b16 %v221
    %v243 = vunpack.c.l.b16 %v222
    %v244 = vunpack.c.h.b16 %v222
    %v245 = vunpack.c.l.b16 %v223
    %v246 = vunpack.c.h.b16 %v223
    %v247 = vunpack.c.l.b16 %v224
    %v248 = vunpack.c.h.b16 %v224
    %v249 = vpack.c.b16 %v233, %v233
    %v250 = vpack.c.b16 %v234, %v234
    %v251 = vpack.c.b16 %v235, %v235
    %v252 = vpack.c.b16 %v236, %v236
    %v253 = vpack.c.b16 %v237, %v237
    %v254 = vpack.c.b16 %v238, %v238
    %v255 = vpack.c.b16 %v239, %v239
    %v256 = vpack.c.b16 %v240, %v240
    %v257 = vpack.c.b16 %v241, %v241
    %v258 = vpack.c.b16 %v242, %v242
    %v259 = vpack.c.b16 %v243, %v243
    %v260 = vpack.c.b16 %v244, %v244
    %v261 = vpack.c.b16 %v245, %v245
    %v262 = vpack.c.b16 %v246, %v246
    %v263 = vpack.c.b16 %v247, %v247
    %v264 = vpack.c.b16 %v248, %v248
    %281 = vst [vmem:[#allocation7] sm:$0xf] %v249
    %282 = vst [vmem:[#allocation7 + $0x4] sm:$0xf] %v250
    %283 = vst [vmem:[#allocation7 + $0x8] sm:$0xf] %v251
    %284 = vst [vmem:[#allocation7 + $0xc] sm:$0xf] %v252
    %285 = vst [vmem:[#allocation7 + $0x10] sm:$0xf] %v253
    %286 = vst [vmem:[#allocation7 + $0x14] sm:$0xf] %v254
    %287 = vst [vmem:[#allocation7 + $0x18] sm:$0xf] %v255
    %288 = vst [vmem:[#allocation7 + $0x1c] sm:$0xf] %v256
    %289 = vst [vmem:[#allocation7 + $0x20] sm:$0xf] %v257
    %290 = vst [vmem:[#allocation7 + $0x24] sm:$0xf] %v258
    %291 = vst [vmem:[#allocation7 + $0x28] sm:$0xf] %v259
    %292 = vst [vmem:[#allocation7 + $0x2c] sm:$0xf] %v260
    %293 = vst [vmem:[#allocation7 + $0x30] sm:$0xf] %v261
    %294 = vst [vmem:[#allocation7 + $0x34] sm:$0xf] %v262
    %295 = vst [vmem:[#allocation7 + $0x38] sm:$0xf] %v263
    %296 = vst [vmem:[#allocation7 + $0x3c] sm:$0xf] %v264
    // Predicated region
    $region18: #{tpu_custom_call.1} parent=1 // pred_check
      _
    $region19: #{tpu_custom_call.1} parent=1 // pred_check_branch
      %298 = sbr.rel (0) target = $region21
    $region20: #{tpu_custom_call.1} parent=1 // pred_region
      %s300 = ssub.s32 1024, 1024
      %301 = vsyncadd [#allocation4], %s300
      %s302 = sshll.u32 [#allocation7], 4
      %s303 = int_to_ptr.vmem [resolvable:$true] %s302
      %308 = dma.vmem_to_hbm [thread:$0]  %s303, 1024, %s2, [#allocation4], 64, 64, 4
    $region21: #{tpu_custom_call.1} parent=1 // pred_fallthru
      _
    // Predicated region
    $region22: #{tpu_custom_call.1} parent=1 // pred_check
      _
    $region23: #{tpu_custom_call.1} parent=1 // pred_check_branch
      %310 = sbr.rel (0) target = $region25
    $region24: #{tpu_custom_call.1} parent=1 // pred_region
      %311 = dma.done [#allocation4], 1024
    $region25: #{tpu_custom_call.1} parent=1 // pred_fallthru
      _
    %312 = vsyncpa [#allocation3], 1
    %313 = vsyncpa [#allocation6], 1
    %314 = vsyncpa [#allocation4], 1

</llo_original>
